<compile_context>
chip_gen: v7x
topology: tpu7x:2x2x1
jax: 0.10.0
libtpu: 0.0.40
codegen_flags: <defaults>
</compile_context>

<pallas_src>
import jax
import jax.numpy as jnp
from jax.experimental import pallas as pl
from jax.experimental.pallas import tpu as pltpu


# ----------------------------------------------------------------------------
# Helpers
# ----------------------------------------------------------------------------
def _round_up(x, m):
    return ((x + m - 1) // m) * m


def _budgets():
    """Generation-aware (block_budget_bytes_for_both_operands, vmem_cap_bytes)."""
    vmem_bytes = 64 << 20  # conservative default (v7x-class)
    try:
        vmem_bytes = int(pltpu.get_tpu_info().vmem_capacity_bytes)
    except Exception:
        pass
    if vmem_bytes <= (64 << 20):     # v7x: 64 MiB VMEM per TensorCore
        return 8 << 20, 48 << 20
    return 16 << 20, 96 << 20        # v5e / v6e: 128 MiB VMEM


_NEG_BIG = -3e38  # finite "-inf" stand-in (avoids 0 * inf = NaN in masking math)


# ----------------------------------------------------------------------------
# Kernels
# ----------------------------------------------------------------------------
def _make_rows_kernel(batch):
    """One batch tile spanning the full class axis -> partial loss sum."""

    def kernel(logits_ref, labels_ref, out_ref):
        i = pl.program_id(0)
        tile_b = logits_ref.shape[0]
        row_ids = i * tile_b + jax.lax.broadcasted_iota(jnp.int32, (tile_b, 1), 0)
        row_valid = row_ids < batch

        x = jnp.where(row_valid, logits_ref[...].astype(jnp.float32), 0.0)
        lab = jnp.where(row_valid, labels_ref[...].astype(jnp.float32), 0.0)

        m = jnp.max(x, axis=-1, keepdims=True)                          # (tb, 1)
        lse = jnp.log(jnp.sum(jnp.exp(x - m), axis=-1, keepdims=True))  # (tb, 1)
        # Single pointwise reduction: sum_c(-lab * logprob) = sum_c(lab*((m+lse)-x))
        per_row = jnp.sum(lab * ((m + lse) - x), axis=-1, keepdims=True)
        per_row = jnp.where(row_valid, per_row, 0.0)

        partial = jnp.sum(per_row)
        out_ref[...] = jnp.broadcast_to(partial, out_ref.shape).astype(jnp.float32)

    return kernel


def _make_rows_cols_kernel(batch, classes):
    """Batch x class tiling with an online logsumexp (huge vocabularies)."""

    def kernel(logits_ref, labels_ref, out_ref, m_sc, d_sc, ls_sc, la_sc):
        i = pl.program_id(0)
        j = pl.program_id(1)
        tile_b, tile_c = logits_ref.shape

        @pl.when(j == 0)
        def _():
            m_sc[...] = jnp.full_like(m_sc, _NEG_BIG)
            d_sc[...] = jnp.zeros_like(d_sc)
            ls_sc[...] = jnp.zeros_like(ls_sc)
            la_sc[...] = jnp.zeros_like(la_sc)

        row_ids = i * tile_b + jax.lax.broadcasted_iota(jnp.int32, (tile_b, 1), 0)
        col_ids = j * tile_c + jax.lax.broadcasted_iota(jnp.int32, (1, tile_c), 1)
        valid = (row_ids < batch) & (col_ids < classes)

        x = jnp.where(valid, logits_ref[...].astype(jnp.float32), _NEG_BIG)
        lab = jnp.where(valid, labels_ref[...].astype(jnp.float32), 0.0)

        m_old = m_sc[...]
        m_new = jnp.maximum(m_old, jnp.max(x, axis=-1, keepdims=True))
        # Rescale running accumulators to the new max, then add this chunk.
        d_sc[...] = d_sc[...] * jnp.exp(m_old - m_new) + jnp.sum(
            jnp.exp(x - m_new), axis=-1, keepdims=True)
        # la = sum_seen lab * (x - m_running): stays max-relative (no cancellation).
        la_sc[...] = (la_sc[...] + ls_sc[...] * (m_old - m_new)
                      + jnp.sum(lab * (x - m_new), axis=-1, keepdims=True))
        ls_sc[...] = ls_sc[...] + jnp.sum(lab, axis=-1, keepdims=True)
        m_sc[...] = m_new

        @pl.when(j == pl.num_programs(1) - 1)
        def _():
            # per_row = ls*(m + log d) - sum(lab*x) = ls*log(d) - sum(lab*(x - m))
            per_row = ls_sc[...] * jnp.log(d_sc[...]) - la_sc[...]
            per_row = jnp.where(row_ids < batch, per_row, 0.0)
            out_ref[...] = jnp.broadcast_to(
                jnp.sum(per_row), out_ref.shape).astype(jnp.float32)

    return kernel


# ----------------------------------------------------------------------------
# pallas_call wrappers
# ----------------------------------------------------------------------------
def _dce_rows(logits, labels, tile_b, vmem_cap):
    B, C = logits.shape
    num_tiles = pl.cdiv(B, tile_b)
    block_bytes = tile_b * C * (logits.dtype.itemsize + labels.dtype.itemsize)
    vmem_limit = int(min(max(2 * block_bytes + (4 << 20), 32 << 20), vmem_cap))

    partials = pl.pallas_call(
        _make_rows_kernel(B),
        out_shape=jax.ShapeDtypeStruct((num_tiles, 1, 128), jnp.float32),
        grid_spec=pltpu.PrefetchScalarGridSpec(
            num_scalar_prefetch=0,
            grid=(num_tiles,),
            in_specs=[
                pl.BlockSpec((tile_b, C), lambda i: (i, 0)),
                pl.BlockSpec((tile_b, C), lambda i: (i, 0)),
            ],
            out_specs=pl.BlockSpec((1, 1, 128), lambda i: (i, 0, 0)),
        ),
        compiler_params=pltpu.CompilerParams(
            dimension_semantics=("parallel",),   # independent tiles -> megacore
            vmem_limit_bytes=vmem_limit,
        ),
    )(logits, labels)
    return jnp.sum(partials[:, 0, 0]) / jnp.float32(B)


def _dce_rows_cols(logits, labels, tile_b, tile_c, vmem_cap):
    B, C = logits.shape
    num_b = pl.cdiv(B, tile_b)
    num_c = pl.cdiv(C, tile_c)
    block_bytes = tile_b * tile_c * (logits.dtype.itemsize + labels.dtype.itemsize)
    scratch_bytes = 4 * tile_b * 128 * 4   # (tile_b,1) f32 pads lanes to 128
    vmem_limit = int(min(max(2 * block_bytes + scratch_bytes + (4 << 20), 32 << 20),
                         vmem_cap))

    partials = pl.pallas_call(
        _make_rows_cols_kernel(B, C),
        out_shape=jax.ShapeDtypeStruct((num_b, 1, 128), jnp.float32),
        grid_spec=pltpu.PrefetchScalarGridSpec(
            num_scalar_prefetch=0,
            grid=(num_b, num_c),                 # class (reduction) axis last
            in_specs=[
                pl.BlockSpec((tile_b, tile_c), lambda i, j: (i, j)),
                pl.BlockSpec((tile_b, tile_c), lambda i, j: (i, j)),
            ],
            out_specs=pl.BlockSpec((1, 1, 128), lambda i, j: (i, 0, 0)),
            scratch_shapes=[pltpu.VMEM((tile_b, 1), jnp.float32)] * 4,
        ),
        compiler_params=pltpu.CompilerParams(
            dimension_semantics=("parallel", "arbitrary"),
            vmem_limit_bytes=vmem_limit,
        ),
    )(logits, labels)
    return jnp.sum(partials[:, 0, 0]) / jnp.float32(B)


def dense_cross_entropy(logits, labels, *, tile_b=None, tile_c=None):
    """Pallas equivalent of DenseCrossEntropy.forward (returns scalar f32)."""
    assert logits.shape == labels.shape
    assert logits.ndim == 2, "expects (batch, num_classes)"
    B, C = logits.shape
    block_budget, vmem_cap = _budgets()
    itemsum = logits.dtype.itemsize + labels.dtype.itemsize
    sublane = 16 if min(logits.dtype.itemsize, labels.dtype.itemsize) == 2 else 8

    if tile_c is not None:
        # Forced class-tiled path (testing / manual override).
        assert tile_c % 128 == 0, "tile_c must be a multiple of 128"
        tb = tile_b if tile_b is not None else min(_round_up(B, sublane), 128)
        return _dce_rows_cols(logits, labels, _round_up(tb, sublane), tile_c, vmem_cap)

    if tile_b is not None:
        return _dce_rows(logits, labels, _round_up(tile_b, sublane), vmem_cap)

    per_row_bytes = C * itemsum
    if sublane * per_row_bytes <= block_budget:
        # Row-strip path: each block spans the full class axis.
        budget_rows = max(sublane,
                          (block_budget // per_row_bytes) // sublane * sublane)
        tb = min(budget_rows, _round_up(B, sublane))
        # Ensure >= 2 tiles so the "parallel" axis feeds both v7x TensorCores.
        if B > sublane and tb >= B:
            tb = _round_up(pl.cdiv(B, 2), sublane)
        return _dce_rows(logits, labels, tb, vmem_cap)

    # Huge class counts: tile the class axis too (online logsumexp keeps every
    # generation VMEM-safe while batch tiles stay large enough to be useful).
    tb = min(_round_up(B, sublane), 128)
    tc = max(128, (block_budget // (tb * itemsum)) // 128 * 128)
    tc = min(tc, _round_up(C, 128))
    return _dce_rows_cols(logits, labels, tb, tc, vmem_cap)


# ----------------------------------------------------------------------------
# Reference + test
# ----------------------------------------------------------------------------
def _reference(logits, labels):
    logits = logits.astype(jnp.float32)
    labels = labels.astype(jnp.float32)
    logprobs = jax.nn.log_softmax(logits, axis=-1)
    loss = jnp.sum(-labels * logprobs, axis=-1)
    return jnp.mean(loss)


def _make_inputs(key, B, C, dtype):
    k1, k2 = jax.random.split(key)
    logits = jax.random.normal(k1, (B, C), dtype=jnp.float32)
    raw = jax.random.uniform(k2, (B, C), dtype=jnp.float32)
    labels = raw / jnp.sum(raw, axis=-1, keepdims=True)
    return logits.astype(dtype), labels.astype(dtype)


if __name__ == "__main__":
    key = jax.random.PRNGKey(0)
    k1, k2, k3 = jax.random.split(key, 3)

    # 1) Small shapes consistent with the module -> auto row-strip path
    #    (split into 2 masked tiles so both TCs would get work).
    logits, labels = _make_inputs(k1, 16, 32, jnp.float32)
    out = jax.block_until_ready(dense_cross_entropy(logits, labels))
    ref = _reference(logits, labels)
    assert jnp.allclose(out, ref, rtol=1e-4, atol=1e-4), (out, ref)

    # 2) Forced class-tiled online-logsumexp path with row AND column masking
    #    (B=50 not a multiple of 8, C=300 not a multiple of 128).
    logits2, labels2 = _make_inputs(k2, 50, 300, jnp.float32)
    out2 = jax.block_until_ready(
        dense_cross_entropy(logits2, labels2, tile_b=16, tile_c=128))
    ref2 = _reference(logits2, labels2)
    assert jnp.allclose(out2, ref2, rtol=1e-4, atol=1e-4), (out2, ref2)

    # 3) bf16 inputs DMA'd natively through the row-tiled "parallel" path
    #    (the .float() cast from the torch module happens inside the kernel).
    logits3, labels3 = _make_inputs(k3, 64, 256, jnp.bfloat16)
    out3 = jax.block_until_ready(dense_cross_entropy(logits3, labels3, tile_b=16))
    ref3 = _reference(logits3, labels3)
    assert jnp.allclose(out3, ref3, rtol=1e-3, atol=1e-3), (out3, ref3)

    print("KERNEL_OK")
</pallas_src>

<mosaic_0001>
module attributes {stable_mosaic.version = 11 : i64} {
  func.func @kernel(%arg0: i32, %arg1: memref<8x32xf32, #tpu.memory_space<vmem>>, %arg2: memref<8x32xf32, #tpu.memory_space<vmem>>, %arg3: memref<1x1x128xf32, #tpu.memory_space<vmem>>) attributes {dimension_semantics = [#tpu.dimension_semantics<parallel>], iteration_bounds = array<i64: 2>, scalar_prefetch = 0 : i64, scratch_operands = 0 : i64, tpu.core_type = #tpu.core_type<tc>, window_params = [{transform_indices = @transform_0, window_bounds = array<i64: 8, 32>}, {transform_indices = @transform_1, window_bounds = array<i64: 8, 32>}, {transform_indices = @transform_2, window_bounds = array<i64: 1, 1, 128>}]} {
    %c8_i32 = arith.constant 8 : i32
    %0 = arith.muli %arg0, %c8_i32 : i32
    %1 = tpu.iota {dimensions = array<i32: 0>} : vector<8x1xi32>
    %2 = vector.broadcast %0 : i32 to vector<8x1xi32>
    %3 = arith.addi %2, %1 : vector<8x1xi32>
    %c16_i32 = arith.constant 16 : i32
    %4 = vector.broadcast %c16_i32 : i32 to vector<8x1xi32>
    %5 = arith.cmpi slt, %3, %4 : vector<8x1xi32>
    %c0 = arith.constant 0 : index
    %c0_0 = arith.constant 0 : index
    %6 = vector.load %arg1[%c0, %c0_0] : memref<8x32xf32, #tpu.memory_space<vmem>>, vector<8x32xf32>
    %cst = arith.constant 0.000000e+00 : f32
    %7 = vector.shape_cast %5 : vector<8x1xi1> to vector<8x1xi1>
    %8 = vector.broadcast %7 : vector<8x1xi1> to vector<8x32xi1>
    %9 = vector.broadcast %cst : f32 to vector<8x32xf32>
    %10 = arith.select %8, %6, %9 : vector<8x32xi1>, vector<8x32xf32>
    %c0_1 = arith.constant 0 : index
    %c0_2 = arith.constant 0 : index
    %11 = vector.load %arg2[%c0_1, %c0_2] : memref<8x32xf32, #tpu.memory_space<vmem>>, vector<8x32xf32>
    %cst_3 = arith.constant 0.000000e+00 : f32
    %12 = vector.shape_cast %5 : vector<8x1xi1> to vector<8x1xi1>
    %13 = vector.broadcast %12 : vector<8x1xi1> to vector<8x32xi1>
    %14 = vector.broadcast %cst_3 : f32 to vector<8x32xf32>
    %15 = arith.select %13, %11, %14 : vector<8x32xi1>, vector<8x32xf32>
    %cst_4 = arith.constant dense<0xFF800000> : vector<8xf32>
    %16 = vector.multi_reduction <maximumf>, %10, %cst_4 [1] : vector<8x32xf32> to vector<8xf32>
    %17 = vector.shape_cast %16 : vector<8xf32> to vector<8x1xf32>
    %18 = vector.broadcast %17 : vector<8x1xf32> to vector<8x32xf32>
    %19 = arith.subf %10, %18 : vector<8x32xf32>
    %20 = math.exp %19 : vector<8x32xf32>
    %cst_5 = arith.constant dense<0.000000e+00> : vector<8xf32>
    %21 = vector.multi_reduction <add>, %20, %cst_5 [1] : vector<8x32xf32> to vector<8xf32>
    %22 = vector.shape_cast %21 : vector<8xf32> to vector<8x1xf32>
    %23 = math.log %22 : vector<8x1xf32>
    %24 = arith.addf %17, %23 : vector<8x1xf32>
    %25 = vector.broadcast %24 : vector<8x1xf32> to vector<8x32xf32>
    %26 = arith.subf %25, %10 : vector<8x32xf32>
    %27 = arith.mulf %15, %26 : vector<8x32xf32>
    %cst_6 = arith.constant dense<0.000000e+00> : vector<8xf32>
    %28 = vector.multi_reduction <add>, %27, %cst_6 [1] : vector<8x32xf32> to vector<8xf32>
    %29 = vector.shape_cast %28 : vector<8xf32> to vector<8x1xf32>
    %cst_7 = arith.constant 0.000000e+00 : f32
    %30 = vector.broadcast %cst_7 : f32 to vector<8x1xf32>
    %31 = arith.select %5, %29, %30 : vector<8x1xi1>, vector<8x1xf32>
    %32 = vector.shape_cast %31 : vector<8x1xf32> to vector<1x8x1xf32>
    %cst_8 = arith.constant dense<0.000000e+00> : vector<1xf32>
    %33 = vector.multi_reduction <add>, %32, %cst_8 [1, 2] : vector<1x8x1xf32> to vector<1xf32>
    %34 = vector.shape_cast %33 : vector<1xf32> to vector<1x1x1xf32>
    %35 = vector.extract %34[0, 0, 0] : f32 from vector<1x1x1xf32>
    %36 = vector.broadcast %35 : f32 to vector<1x1x128xf32>
    %c0_9 = arith.constant 0 : index
    %c0_10 = arith.constant 0 : index
    %c0_11 = arith.constant 0 : index
    %37 = vector.load %arg3[%c0_9, %c0_10, %c0_11] : memref<1x1x128xf32, #tpu.memory_space<vmem>>, vector<1x1x128xf32>
    tpu.vector_store %arg3[%c0_9, %c0_10, %c0_11], %36 {strides = array<i32>} : memref<1x1x128xf32, #tpu.memory_space<vmem>>, vector<1x1x128xf32>,
    return
  }
  func.func @transform_0(%arg0: i32) -> (i32, i32) {
    %c0_i32 = arith.constant 0 : i32
    %c0_i32_0 = arith.constant 0 : i32
    return %arg0, %c0_i32 : i32, i32
  }
  func.func @transform_1(%arg0: i32) -> (i32, i32) {
    %c0_i32 = arith.constant 0 : i32
    %c0_i32_0 = arith.constant 0 : i32
    return %arg0, %c0_i32 : i32, i32
  }
  func.func @transform_2(%arg0: i32) -> (i32, i32, i32) {
    %c0_i32 = arith.constant 0 : i32
    %c0_i32_0 = arith.constant 0 : i32
    %c0_i32_1 = arith.constant 0 : i32
    return %arg0, %c0_i32, %c0_i32_0 : i32, i32, i32
  }
}

</mosaic_0001>

<llo_original>
// kernel: tpu_custom_call.1
$region0: #{tpu_custom_call.1}
  #allocation0 [shape = 'u32[]', space=smem, size = 0x4, offset = 0x4, fixed_abs, tag = 'smem constant byte address 0x4 - core index']
  #allocation1 [shape = 'u32[144,128]{1,0:T(1,128)}', space=vmem, size = 0x12000, scoped, tag = 'internal scratch']
  %s0 = inlined_call_operand.hbm [shape: f32[16,32], index: 0, kind: input, shape index: {}]
  %s1 = inlined_call_operand.hbm [shape: f32[16,32], index: 1, kind: input, shape index: {}]
  %s2 = inlined_call_operand.hbm [shape: f32[2,1,128], index: 2, kind: output, shape index: {}]
  %s3 = sld [smem:[#allocation0]]
  $region49: #{tpu_custom_call.1} parent=0
    _
  %s5 = ssub.s32 1, %s3
  %s6 = scalar_select 0, %s5, %s3
  $region1: #{tpu_custom_call.1} parent=0
    #allocation2 [shape = 'u8[8192]{0}', space=vmem, size = 0x2000, scoped, tag = 'input window, operand 0']
    #allocation3 [shape = 's32[2]{0}', space=sflag, size = 0x8, scoped, tag = 'scoped memory for tpu_custom_call.1']
    #allocation4 [shape = 's32[2]{0}', space=sflag, size = 0x8, scoped, tag = 'scoped memory for tpu_custom_call.1']
    #allocation5 [shape = 'u8[8192]{0}', space=vmem, size = 0x2000, scoped, tag = 'input window, operand 1']
    #allocation6 [shape = 's32[2]{0}', space=sflag, size = 0x8, scoped, tag = 'scoped memory for tpu_custom_call.1']
    #allocation7 [shape = 'u8[1024]{0}', space=vmem, size = 0x400, scoped, tag = 'output window, operand 0']
    %7 = vsyncpa [#allocation3], 0
    %s8 = scalar_lea.sflag [#allocation3], 1
    %9 = vsyncpa %s8, 0
    %10 = vsyncpa [#allocation6], 0
    %s11 = scalar_lea.sflag [#allocation6], 1
    %12 = vsyncpa %s11, 0
    %13 = vsyncpa [#allocation4], 0
    %s14 = scalar_lea.sflag [#allocation4], 1
    %15 = vsyncpa %s14, 0
    loop: start=0, step=1, limit=4
    $region2: #{tpu_custom_call.1} parent=1 // loop_pre_header
      _
    $region3: #{tpu_custom_call.1} parent=1 // loop_header
      %s17 = sphi 0, %s21
      %p18 = scmp.ge.s32.totalorder %s17, 4
      %s27 = sphi 0, %s29
      %s30 = sphi 0, %s27
      %s31 = sphi 0, %s30
      %s47 = sphi 0, %s31
      %s53 = sphi 0, %s55
      %s56 = sphi 0, %s53
      %s57 = sphi 0, %s56
      %s73 = sphi 0, %s57
      %s79 = sphi 0, %s81
      %s82 = sphi 0, %s79
      %s83 = sphi 0, %s82
      %s99 = sphi 0, %s83
    $region4: #{tpu_custom_call.1} parent=1 // loop_header_branch
      %20 = sbr.rel (%p18) target = $region8
    $region5: #{tpu_custom_call.1} parent=1 // loop_body
      %s22 = ssub.s32 %s17, 1
      %s23 = ssub.s32 %s17, 2
      %s24 = sadd.s32 %s17, 1
      %s25 = ssub.s32 %s17, %s24
      %p26 = scmp.eq.s32.totalorder %s25, 0
      %s28 = sadd.s32 %s27, 1
      %s29 = scalar_select %p26, %s27, %s28
      %p32 = pneg %p26
      %p33 = scmp.eq.s32.totalorder %s17, 1
      %p34 = por %p32, %p33
      %p35 = scmp.ne.s32.totalorder %s27, %s30
      %p36 = scmp.eq.s32.totalorder %s17, 0
      %p37 = por %p35, %p36
      %p38 = scmp.ne.s32.totalorder %s27, %s30
      %p39 = scmp.eq.s32.totalorder %s22, 1
      %p40 = por %p38, %p39
      %p41 = scmp.ne.s32.totalorder %s30, %s31
      %p42 = scmp.eq.s32.totalorder %s22, 0
      %p43 = por %p41, %p42
      %p44 = scmp.ne.s32.totalorder %s30, %s31
      %p45 = scmp.eq.s32.totalorder %s23, 1
      %p46 = por %p44, %p45
      %p48 = scmp.ne.s32.totalorder %s31, %s47
      %p49 = scmp.eq.s32.totalorder %s23, 0
      %p50 = por %p48, %p49
      %s51 = ssub.s32 %s17, %s24
      %p52 = scmp.eq.s32.totalorder %s51, 0
      %s54 = sadd.s32 %s53, 1
      %s55 = scalar_select %p52, %s53, %s54
      %p58 = pneg %p52
      %p59 = scmp.eq.s32.totalorder %s17, 1
      %p60 = por %p58, %p59
      %p61 = scmp.ne.s32.totalorder %s53, %s56
      %p62 = scmp.eq.s32.totalorder %s17, 0
      %p63 = por %p61, %p62
      %p64 = scmp.ne.s32.totalorder %s53, %s56
      %p65 = scmp.eq.s32.totalorder %s22, 1
      %p66 = por %p64, %p65
      %p67 = scmp.ne.s32.totalorder %s56, %s57
      %p68 = scmp.eq.s32.totalorder %s22, 0
      %p69 = por %p67, %p68
      %p70 = scmp.ne.s32.totalorder %s56, %s57
      %p71 = scmp.eq.s32.totalorder %s23, 1
      %p72 = por %p70, %p71
      %p74 = scmp.ne.s32.totalorder %s57, %s73
      %p75 = scmp.eq.s32.totalorder %s23, 0
      %p76 = por %p74, %p75
      %s77 = ssub.s32 %s17, %s24
      %p78 = scmp.eq.s32.totalorder %s77, 0
      %s80 = sadd.s32 %s79, 1
      %s81 = scalar_select %p78, %s79, %s80
      %p84 = pneg %p78
      %p85 = scmp.eq.s32.totalorder %s17, 1
      %p86 = por %p84, %p85
      %p87 = scmp.ne.s32.totalorder %s79, %s82
      %p88 = scmp.eq.s32.totalorder %s17, 0
      %p89 = por %p87, %p88
      %p90 = scmp.ne.s32.totalorder %s79, %s82
      %p91 = scmp.eq.s32.totalorder %s22, 1
      %p92 = por %p90, %p91
      %p93 = scmp.ne.s32.totalorder %s82, %s83
      %p94 = scmp.eq.s32.totalorder %s22, 0
      %p95 = por %p93, %p94
      %p96 = scmp.ne.s32.totalorder %s82, %s83
      %p97 = scmp.eq.s32.totalorder %s23, 1
      %p98 = por %p96, %p97
      %p100 = scmp.ne.s32.totalorder %s83, %s99
      %p101 = scmp.eq.s32.totalorder %s23, 0
      %p102 = por %p100, %p101
      %p103 = scmp.le.s32.totalorder 1, %s17
      %p104 = scmp.lt.s32.totalorder %s17, 3
      %p105 = pnand %p103, %p104
      %p106 = pneg %p105
      // Predicated region
      $region9: #{tpu_custom_call.1} parent=5 // pred_check
        _
      $region10: #{tpu_custom_call.1} parent=5 // pred_check_branch
        %108 = sbr.rel (%p105) target = $region12
      $region11: #{tpu_custom_call.1} parent=5 // pred_region
        %s109 = ssub.s32 %s17, 1
      $region12: #{tpu_custom_call.1} parent=5 // pred_fallthru
        _
      %p110 = scmp.lt.s32.totalorder %s17, 2
      // Predicated region
      $region13: #{tpu_custom_call.1} parent=5 // pred_check
        %p111 = pneg %p110
      $region14: #{tpu_custom_call.1} parent=5 // pred_check_branch
        %113 = sbr.rel (%p111) target = $region16
      $region15: #{tpu_custom_call.1} parent=5 // pred_region
        // Predicated region
        $region17: #{tpu_custom_call.1} parent=15 // pred_check
          %p114 = pneg %p37
        $region18: #{tpu_custom_call.1} parent=15 // pred_check_branch
          %116 = sbr.rel (%p114) target = $region20
        $region19: #{tpu_custom_call.1} parent=15 // pred_region
          %s117 = sand.u32 %s27, 1
          %s118 = scalar_lea.sflag [#allocation3], %s117
          %s119 = sand.u32 %s27, 1
          %s120 = smul.addr %s119, 8
          %s121 = scalar_lea.vmem [#allocation2], %s120
          %s123 = ssub.s32 128, 128
          %124 = vsyncadd %s118, %s123
          %s125 = smul.addr %s17, 128
          %s126 = scalar_lea.hbm %s0, %s125
          %s128 = sshll.u32 %s121, 4
          %s129 = int_to_ptr.vmem [resolvable:$true] %s128
          %131 = dma.hbm_to_vmem [thread:$0]  %s126, 128, %s129, %s118
        $region20: #{tpu_custom_call.1} parent=15 // pred_fallthru
          _
        // Predicated region
        $region21: #{tpu_custom_call.1} parent=15 // pred_check
          %p132 = pneg %p63
        $region22: #{tpu_custom_call.1} parent=15 // pred_check_branch
          %134 = sbr.rel (%p132) target = $region24
        $region23: #{tpu_custom_call.1} parent=15 // pred_region
          %s135 = sand.u32 %s53, 1
          %s136 = scalar_lea.sflag [#allocation6], %s135
          %s137 = sand.u32 %s53, 1
          %s138 = smul.addr %s137, 8
          %s139 = scalar_lea.vmem [#allocation5], %s138
          %s141 = ssub.s32 128, 128
          %142 = vsyncadd %s136, %s141
          %s143 = smul.addr %s17, 128
          %s144 = scalar_lea.hbm %s1, %s143
          %s146 = sshll.u32 %s139, 4
          %s147 = int_to_ptr.vmem [resolvable:$true] %s146
          %149 = dma.hbm_to_vmem [thread:$0]  %s144, 128, %s147, %s136
        $region24: #{tpu_custom_call.1} parent=15 // pred_fallthru
          _
      $region16: #{tpu_custom_call.1} parent=5 // pred_fallthru
        _
      %p150 = scmp.le.s32.totalorder 1, %s17
      %p151 = scmp.lt.s32.totalorder %s17, 3
      %p152 = pnand %p150, %p151
      %p153 = pneg %p152
      // Predicated region
      $region25: #{tpu_custom_call.1} parent=5 // pred_check
        _
      $region26: #{tpu_custom_call.1} parent=5 // pred_check_branch
        %155 = sbr.rel (%p152) target = $region28
      $region27: #{tpu_custom_call.1} parent=5 // pred_region
        %s156 = ssub.s32 %s17, 1
        %s157 = sand.u32 %s30, 1
        %s158 = scalar_lea.sflag [#allocation3], %s157
        %s159 = sand.u32 %s30, 1
        %s160 = smul.addr %s159, 8
        %s161 = scalar_lea.vmem [#allocation2], %s160
        // Predicated region
        $region29: #{tpu_custom_call.1} parent=27 // pred_check
          %p162 = pneg %p43
        $region30: #{tpu_custom_call.1} parent=27 // pred_check_branch
          %164 = sbr.rel (%p162) target = $region32
        $region31: #{tpu_custom_call.1} parent=27 // pred_region
          %165 = dma.done %s158, 128
        $region32: #{tpu_custom_call.1} parent=27 // pred_fallthru
          _
        %s166 = sand.u32 %s56, 1
        %s167 = scalar_lea.sflag [#allocation6], %s166
        %s168 = sand.u32 %s56, 1
        %s169 = smul.addr %s168, 8
        %s170 = scalar_lea.vmem [#allocation5], %s169
        // Predicated region
        $region33: #{tpu_custom_call.1} parent=27 // pred_check
          %p171 = pneg %p69
        $region34: #{tpu_custom_call.1} parent=27 // pred_check_branch
          %173 = sbr.rel (%p171) target = $region36
        $region35: #{tpu_custom_call.1} parent=27 // pred_region
          %174 = dma.done %s167, 128
        $region36: #{tpu_custom_call.1} parent=27 // pred_fallthru
          _
        %s175 = sand.u32 %s30, 1
        %s176 = scalar_lea.sflag [#allocation3], %s175
        %s177 = sand.u32 %s30, 1
        %s178 = smul.addr %s177, 8
        %s179 = scalar_lea.vmem [#allocation2], %s178
        %p180 = pneg %p43
        %p181 = pneg %p40
        %s182 = sand.u32 %s56, 1
        %s183 = scalar_lea.sflag [#allocation6], %s182
        %s184 = sand.u32 %s56, 1
        %s185 = smul.addr %s184, 8
        %s186 = scalar_lea.vmem [#allocation5], %s185
        %p187 = pneg %p69
        %p188 = pneg %p66
        %p189 = pneg %p95
        %p190 = pneg %p92
        %s191 = sand.u32 %s82, 1
        %s192 = scalar_lea.sflag [#allocation4], %s191
        %s193 = sand.u32 %s82, 1
        %s194 = scalar_lea.vmem [#allocation7], %s193
        %s195 = smul.u32 %s22, 8
        %v196 = vlaneseq
        %v197 = vshrl.u32 %v196, 7
        %v198 = vstv %s195
        %v199 = vadd.s32 %v198, %v197
        %vm200 = vcmp.lt.s32.totalorder %v199, 16
        %v201 = vld [vmem:[%s161] sm:$0xff]
        %v202 = vsel %vm200, 1, 0
        %vm203 = vcmp.eq.s32.totalorder %v202, 1
        %v204 = vsel %vm203, %v201, 0.0
        %v205 = vld [vmem:[%s170] sm:$0xff]
        %v206 = vsel %vm203, %v205, 0.0
        %vm207 = vcmask 261120
        %v208 = vsel %vm207, %v204, -inf
        %209 = vmax.xlane.f32.xlu0 %v208
        %v210 = vpop.xlane.xlu0 %209
        %v211 = vsub.f32 %v204, %v210
        %v212 = vmul.f32 %v211, 1.442695
        %v213 = vpow.pop %v212
        %v214 = vsel %vm207, %v213, 0.0
        %215 = vadd.xlane.f32.xlu0 %v214
        %v216 = vpop.xlane.xlu0 %215
        %v217 = vlog2.pop %v216
        %v218 = vmul.f32 %v217, 0.6931472
        %v219 = vadd.f32 %v210, %v218
        %v220 = vsub.f32 %v219, %v204
        %v221 = vmul.f32 %v206, %v220
        %v222 = vsel %vm207, %v221, 0.0
        %223 = vadd.xlane.f32.xlu0 %v222
        %v224 = vpop.xlane.xlu0 %223
        %v225 = vsel %vm200, %v224, 0.0
        %vm226 = vcmask 7168
        %v227 = vsel %vm226, %v225, 0.0
        %228 = vadd.xlane.f32.xlu0 %v227
        %v229 = vpop.xlane.xlu0 %228
        %v230 = vrot.slane %v229, 4
        %v231 = vadd.f32 %v229, %v230
        %v232 = vrot.slane %v231, 2
        %v233 = vadd.f32 %v231, %v232
        %v234 = vrot.slane %v233, 1
        %v235 = vadd.f32 %v233, %v234
        %s236 = vtos %v235
        %v237 = vstv %s236
        %238 = vst [vmem:[%s194] sm:$0x1] %v237
        %s239 = sand.u32 %s82, 1
        %s240 = scalar_lea.sflag [#allocation4], %s239
        %s241 = sand.u32 %s82, 1
        %s242 = scalar_lea.vmem [#allocation7], %s241
        // Predicated region
        $region37: #{tpu_custom_call.1} parent=27 // pred_check
          %p243 = pneg %p92
        $region38: #{tpu_custom_call.1} parent=27 // pred_check_branch
          %245 = sbr.rel (%p243) target = $region40
        $region39: #{tpu_custom_call.1} parent=27 // pred_region
          %s247 = ssub.s32 16, 16
          %248 = vsyncadd %s240, %s247
          %s249 = smul.addr %s22, 16
          %s250 = scalar_lea.hbm %s2, %s249
          %s252 = sshll.u32 %s242, 4
          %s253 = int_to_ptr.vmem [resolvable:$true] %s252
          %255 = dma.vmem_to_hbm [thread:$0]  %s253, 16, %s250, %s240
        $region40: #{tpu_custom_call.1} parent=27 // pred_fallthru
          _
      $region28: #{tpu_custom_call.1} parent=5 // pred_fallthru
        _
      %p256 = scmp.le.s32.totalorder 2, %s17
      // Predicated region
      $region41: #{tpu_custom_call.1} parent=5 // pred_check
        %p257 = pneg %p256
      $region42: #{tpu_custom_call.1} parent=5 // pred_check_branch
        %259 = sbr.rel (%p257) target = $region44
      $region43: #{tpu_custom_call.1} parent=5 // pred_region
        %s260 = ssub.s32 %s17, 2
        // Predicated region
        $region45: #{tpu_custom_call.1} parent=43 // pred_check
          %p261 = pneg %p98
        $region46: #{tpu_custom_call.1} parent=43 // pred_check_branch
          %263 = sbr.rel (%p261) target = $region48
        $region47: #{tpu_custom_call.1} parent=43 // pred_region
          %s264 = sand.u32 %s83, 1
          %s265 = scalar_lea.sflag [#allocation4], %s264
          %s266 = sand.u32 %s83, 1
          %s267 = scalar_lea.vmem [#allocation7], %s266
          %268 = dma.done %s265, 16
        $region48: #{tpu_custom_call.1} parent=43 // pred_fallthru
          _
      $region44: #{tpu_custom_call.1} parent=5 // pred_fallthru
        _
    $region6: #{tpu_custom_call.1} parent=1 // loop_footer
      %s21 = sadd.s32 1, %s17
    $region7: #{tpu_custom_call.1} parent=1 // loop_footer_branch
      %16 = sbr.rel target = $region3
    $region8: #{tpu_custom_call.1} parent=1 // loop_exit
      _
    %269 = vsyncpa [#allocation3], 1
    %s270 = scalar_lea.sflag [#allocation3], 1
    %271 = vsyncpa %s270, 1
    %272 = vsyncpa [#allocation6], 1
    %s273 = scalar_lea.sflag [#allocation6], 1
    %274 = vsyncpa %s273, 1
    %275 = vsyncpa [#allocation4], 1
    %s276 = scalar_lea.sflag [#allocation4], 1
    %277 = vsyncpa %s276, 1

</llo_original>
